<compile_context>
chip_gen: v5e
topology: v5e:2x2
jax: 0.10.0
libtpu: 0.0.40
codegen_flags: <defaults>
</compile_context>

<pallas_src>
import functools

import jax
import jax.numpy as jnp
from jax.experimental import pallas as pl
from jax.experimental.pallas import tpu as pltpu


def _round_up(x: int, m: int) -> int:
    return ((x + m - 1) // m) * m


def _largest_divisor_tile(dim_pad: int, unit: int, cap: int) -> int:
    """Largest multiple of `unit` that divides `dim_pad` and is <= cap."""
    cap = max(unit, min(cap, dim_pad))
    t = cap - (cap % unit)
    while t > unit:
        if dim_pad % t == 0:
            return t
        t -= unit
    return unit  # dim_pad is a round_up(unit) multiple, so unit always divides


def _linear_bias_kernel(x_ref, w_ref, b_ref, o_ref, acc_ref):
    # x_ref: (tm, tk)  w_ref: (tk, tn)  b_ref: (1, tn) f32  o_ref: (tm, tn)
    k = pl.program_id(2)

    @pl.when(k == 0)
    def _init():
        acc_ref[...] = jnp.zeros_like(acc_ref)

    acc_ref[...] += jnp.dot(x_ref[...], w_ref[...],
                            preferred_element_type=jnp.float32)

    @pl.when(k == pl.num_programs(2) - 1)
    def _finalize():
        # Bias add + cast once per output tile (off the K-loop critical path).
        o_ref[...] = (acc_ref[...] + b_ref[...]).astype(o_ref.dtype)


def prepare_classifier_params(weight, bias, compute_dtype=jnp.bfloat16):
    """One-time parameter prep — hoist out of the inference hot path.

    weight: (out_dim, in_dim)  (PyTorch nn.Linear layout)
    bias:   (out_dim,)
    Returns:
      w_padded_t: (K_pad, N_pad) = weight.T in compute_dtype, zero-padded to
                  128-multiples (kernel contracts it without any transpose).
      b_padded:   (1, N_pad) float32.
    """
    out_dim, in_dim = weight.shape
    k_pad = _round_up(in_dim, 128)
    n_pad = _round_up(out_dim, 128)
    w_t = jnp.asarray(weight, compute_dtype).T                     # (K, N)
    w_p = jnp.pad(w_t, ((0, k_pad - in_dim), (0, n_pad - out_dim)))
    b_p = jnp.pad(jnp.asarray(bias, jnp.float32), (0, n_pad - out_dim))
    return w_p, b_p.reshape(1, n_pad)


@functools.partial(jax.jit,
                   static_argnames=("out_dim", "use_pallas", "tile_caps"))
def single_classifier_forward(x, w_padded_t, b_padded, out_dim,
                              use_pallas=None, tile_caps=None):
    """SingleClassifier forward: Linear -> Dropout(identity at eval).

    x:          (B, in_dim)
    w_padded_t: (K_pad, N_pad) from prepare_classifier_params (pre-transposed)
    b_padded:   (1, N_pad) f32 from prepare_classifier_params
    out_dim:    static true output width
    use_pallas: True/False to force a path; None = size-based heuristic
    tile_caps:  optional static (cap_m, cap_n, cap_k) override (testing)
    Returns (B, out_dim) in x.dtype.
    """
    B, K = x.shape
    K_pad, N_pad = w_padded_t.shape
    assert K_pad >= K and b_padded.shape == (1, N_pad) and out_dim <= N_pad
    out_dtype = x.dtype
    compute_dtype = w_padded_t.dtype

    if use_pallas is None:
        # Tiny heads: padding + fixed pallas_call/grid-step overhead dwarf
        # the actual math; XLA's fused dot is strictly faster.
        use_pallas = (B * K * out_dim) >= (1 << 20)

    if not use_pallas:
        y = jnp.dot(x.astype(compute_dtype), w_padded_t[:K, :out_dim],
                    preferred_element_type=jnp.float32)
        return (y + b_padded[0, :out_dim]).astype(out_dtype)

    # ---------------- tile plan (divisor-based, no weight re-pad) ----------
    in_elt = jnp.dtype(compute_dtype).itemsize
    out_elt = jnp.dtype(out_dtype).itemsize
    unit_m = 16 if in_elt < 4 else 8       # bf16 packs 2 rows per sublane

    if tile_caps is None:
        cap_m, cap_n = 512, 512
        cap_k = 2048 if in_elt < 4 else 1024
    else:
        cap_m, cap_n, cap_k = tile_caps

    B_pad = _round_up(B, unit_m)
    tm = _largest_divisor_tile(B_pad, unit_m, cap_m)
    tn = _largest_divisor_tile(N_pad, 128, cap_n)
    tk = _largest_divisor_tile(K_pad, 128, cap_k)

    # v7x has two TensorCores: try to guarantee >= 2 parallel grid steps.
    if (B_pad // tm) * (N_pad // tn) < 2:
        if tn % 256 == 0:
            tn //= 2
        elif tm % (2 * unit_m) == 0:
            tm //= 2

    # ---------------- generation-aware VMEM budget -------------------------
    try:
        vmem_cap = int(pltpu.get_tpu_info().vmem_capacity_bytes)
    except Exception:
        vmem_cap = 64 * 1024 * 1024        # conservative: v7x per-core VMEM

    def vmem_est(tm_, tn_, tk_):
        return (2 * tm_ * tk_ * in_elt      # x tiles, double-buffered
                + 2 * tk_ * tn_ * in_elt    # W tiles, double-buffered
                + 2 * tm_ * tn_ * out_elt   # out tiles, double-buffered
                + tm_ * tn_ * 4             # f32 accumulator scratch
                + 2 * tn_ * 4)              # bias tile (re-DMAed per j; tiny)

    budget = int(0.55 * vmem_cap)
    while vmem_est(tm, tn, tk) > budget:
        if tk % 256 == 0:
            tk //= 2
        elif tn % 256 == 0:
            tn //= 2
        elif tm % (2 * unit_m) == 0:
            tm //= 2
        else:
            break
    vmem_limit = int(min(max(2 * vmem_est(tm, tn, tk), 16 * 1024 * 1024),
                         int(0.75 * vmem_cap)))

    # Only the activation may need padding (no-op when B,K already aligned).
    x_c = x.astype(compute_dtype)
    if B_pad != B or K_pad != K:
        x_c = jnp.pad(x_c, ((0, B_pad - B), (0, K_pad - K)))

    grid = (B_pad // tm, N_pad // tn, K_pad // tk)

    flops = 2 * B_pad * N_pad * K_pad
    bytes_accessed = (B_pad * K_pad * in_elt * (N_pad // tn)     # x re-reads
                      + K_pad * N_pad * in_elt * (B_pad // tm)   # W re-reads
                      + B_pad * N_pad * out_elt + N_pad * 4)

    out_padded = pl.pallas_call(
        _linear_bias_kernel,
        out_shape=jax.ShapeDtypeStruct((B_pad, N_pad), out_dtype),
        grid_spec=pltpu.PrefetchScalarGridSpec(
            num_scalar_prefetch=0,
            grid=grid,
            in_specs=[
                pl.BlockSpec((tm, tk), lambda i, j, k: (i, k)),   # x tile
                pl.BlockSpec((tk, tn), lambda i, j, k: (k, j)),   # W^T tile
                pl.BlockSpec((1, tn), lambda i, j, k: (0, j)),    # bias tile
            ],
            out_specs=pl.BlockSpec((tm, tn), lambda i, j, k: (i, j)),
            scratch_shapes=[pltpu.VMEM((tm, tn), jnp.float32)],
        ),
        compiler_params=pltpu.CompilerParams(
            dimension_semantics=("parallel", "parallel", "arbitrary"),
            vmem_limit_bytes=vmem_limit,
        ),
        cost_estimate=pl.CostEstimate(flops=flops, transcendentals=0,
                                      bytes_accessed=bytes_accessed),
    )(x_c, w_padded_t, b_padded)

    return out_padded[:B, :out_dim]


if __name__ == "__main__":
    # Shapes consistent with the module: batch=8, in_dim=32, out_dim=16.
    B, IN_DIM, OUT_DIM = 8, 32, 16
    DROPOUT_P = 0.5  # identity at inference

    key = jax.random.PRNGKey(0)
    kx, kw, kb = jax.random.split(key, 3)
    x = jax.random.normal(kx, (B, IN_DIM), dtype=jnp.float32)
    bound = 1.0 / (IN_DIM ** 0.5)
    weight = jax.random.uniform(kw, (OUT_DIM, IN_DIM), jnp.float32, -bound, bound)
    bias = jax.random.uniform(kb, (OUT_DIM,), jnp.float32, -bound, bound)

    ref = x @ weight.T + bias

    # 1) f32 compute path, forced through the Pallas kernel (tight tolerance).
    w_f32, b_f32 = prepare_classifier_params(weight, bias, jnp.float32)
    out_f32 = single_classifier_forward(x, w_f32, b_f32, OUT_DIM, use_pallas=True)
    jax.block_until_ready(out_f32)
    assert out_f32.shape == (B, OUT_DIM)
    assert jnp.allclose(out_f32, ref, atol=1e-5, rtol=1e-5)

    # 2) Default bf16-MXU / f32-accumulate path, forced through Pallas.
    w_bf16, b_bf16 = prepare_classifier_params(weight, bias, jnp.bfloat16)
    out_bf16 = single_classifier_forward(x, w_bf16, b_bf16, OUT_DIM, use_pallas=True)
    jax.block_until_ready(out_bf16)
    assert jnp.allclose(out_bf16, ref, atol=5e-2, rtol=5e-2)

    # 3) Auto heuristic: tiny head dispatches to the fused-XLA fast path.
    out_fast = single_classifier_forward(x, w_bf16, b_bf16, OUT_DIM)
    jax.block_until_ready(out_fast)
    assert jnp.allclose(out_fast, ref, atol=5e-2, rtol=5e-2)

    # 4) Medium non-aligned shapes with small tile caps to exercise the full
    #    multi-step (i, j, k) grid, padding, and accumulator init/finalize.
    B2, K2, N2 = 48, 320, 272
    kx2, kw2, kb2 = jax.random.split(jax.random.PRNGKey(1), 3)
    x2 = jax.random.normal(kx2, (B2, K2), jnp.float32)
    b2d = 1.0 / (K2 ** 0.5)
    w2 = jax.random.uniform(kw2, (N2, K2), jnp.float32, -b2d, b2d)
    bi2 = jax.random.uniform(kb2, (N2,), jnp.float32, -b2d, b2d)
    ref2 = x2 @ w2.T + bi2
    w2_p, b2_p = prepare_classifier_params(w2, bi2, jnp.float32)
    out2 = single_classifier_forward(x2, w2_p, b2_p, N2,
                                     use_pallas=True, tile_caps=(32, 128, 128))
    jax.block_until_ready(out2)
    assert out2.shape == (B2, N2)
    assert jnp.allclose(out2, ref2, atol=1e-4, rtol=1e-4)

    print("KERNEL_OK")
</pallas_src>

<mosaic_0001>
module attributes {stable_mosaic.version = 11 : i64} {
  func.func @_linear_bias_kernel(%arg0: i32, %arg1: i32, %arg2: i32, %arg3: memref<8x128xf32, #tpu.memory_space<vmem>>, %arg4: memref<128x128xf32, #tpu.memory_space<vmem>>, %arg5: memref<1x128xf32, #tpu.memory_space<vmem>>, %arg6: memref<8x128xf32, #tpu.memory_space<vmem>>, %arg7: memref<8x128xf32, #tpu.memory_space<vmem>>) attributes {dimension_semantics = [#tpu.dimension_semantics<parallel>, #tpu.dimension_semantics<parallel>, #tpu.dimension_semantics<arbitrary>], iteration_bounds = array<i64: 1, 1, 1>, scalar_prefetch = 0 : i64, scratch_operands = 1 : i64, tpu.core_type = #tpu.core_type<tc>, window_params = [{transform_indices = @transform_0, window_bounds = array<i64: 8, 128>}, {transform_indices = @transform_1, window_bounds = array<i64: 128, 128>}, {transform_indices = @transform_2, window_bounds = array<i64: 1, 128>}, {transform_indices = @transform_3, window_bounds = array<i64: 8, 128>}]} {
    %c0_i32 = arith.constant 0 : i32
    %0 = arith.cmpi eq, %arg2, %c0_i32 : i32
    %1 = arith.extui %0 : i1 to i32
    %c0_i32_0 = arith.constant 0 : i32
    %2 = arith.cmpi ne, %1, %c0_i32_0 : i32
    scf.if %2 {
      %cst_10 = arith.constant 0.000000e+00 : f32
      %12 = vector.broadcast %cst_10 : f32 to vector<8x128xf32>
      %c0_11 = arith.constant 0 : index
      %c0_12 = arith.constant 0 : index
      %13 = vector.load %arg7[%c0_11, %c0_12] : memref<8x128xf32, #tpu.memory_space<vmem>>, vector<8x128xf32>
      tpu.vector_store %arg7[%c0_11, %c0_12], %12 {strides = array<i32>} : memref<8x128xf32, #tpu.memory_space<vmem>>, vector<8x128xf32>,
    } else {
    }
    %c0 = arith.constant 0 : index
    %c0_1 = arith.constant 0 : index
    %3 = vector.load %arg7[%c0, %c0_1] : memref<8x128xf32, #tpu.memory_space<vmem>>, vector<8x128xf32>
    %c0_2 = arith.constant 0 : index
    %c0_3 = arith.constant 0 : index
    %4 = vector.load %arg3[%c0_2, %c0_3] : memref<8x128xf32, #tpu.memory_space<vmem>>, vector<8x128xf32>
    %c0_4 = arith.constant 0 : index
    %c0_5 = arith.constant 0 : index
    %5 = vector.load %arg4[%c0_4, %c0_5] : memref<128x128xf32, #tpu.memory_space<vmem>>, vector<128x128xf32>
    %cst = arith.constant dense<0.000000e+00> : vector<8x128xf32>
    %6 = tpu.matmul %4, %5, %cst {dimension_numbers = #tpu.dot_dimension_numbers<[1], [0], [0], [1], [0, 0, 1, 1], [], []>} : vector<8x128xf32>, vector<128x128xf32>, vector<8x128xf32> -> vector<8x128xf32>
    %7 = arith.addf %3, %6 : vector<8x128xf32>
    %c0_6 = arith.constant 0 : index
    %c0_7 = arith.constant 0 : index
    %8 = vector.load %arg7[%c0_6, %c0_7] : memref<8x128xf32, #tpu.memory_space<vmem>>, vector<8x128xf32>
    tpu.vector_store %arg7[%c0_6, %c0_7], %7 {strides = array<i32>} : memref<8x128xf32, #tpu.memory_space<vmem>>, vector<8x128xf32>,
    %c0_i32_8 = arith.constant 0 : i32
    %9 = arith.cmpi eq, %arg2, %c0_i32_8 : i32
    %10 = arith.extui %9 : i1 to i32
    %c0_i32_9 = arith.constant 0 : i32
    %11 = arith.cmpi ne, %10, %c0_i32_9 : i32
    scf.if %11 {
      %c0_10 = arith.constant 0 : index
      %c0_11 = arith.constant 0 : index
      %12 = vector.load %arg7[%c0_10, %c0_11] : memref<8x128xf32, #tpu.memory_space<vmem>>, vector<8x128xf32>
      %c0_12 = arith.constant 0 : index
      %c0_13 = arith.constant 0 : index
      %13 = vector.load %arg5[%c0_12, %c0_13] : memref<1x128xf32, #tpu.memory_space<vmem>>, vector<1x128xf32>
      %14 = vector.broadcast %13 : vector<1x128xf32> to vector<8x128xf32>
      %15 = arith.addf %12, %14 : vector<8x128xf32>
      %c0_14 = arith.constant 0 : index
      %c0_15 = arith.constant 0 : index
      %16 = vector.load %arg6[%c0_14, %c0_15] : memref<8x128xf32, #tpu.memory_space<vmem>>, vector<8x128xf32>
      tpu.vector_store %arg6[%c0_14, %c0_15], %15 {strides = array<i32>} : memref<8x128xf32, #tpu.memory_space<vmem>>, vector<8x128xf32>,
    } else {
    }
    return
  }
  func.func @transform_0(%arg0: i32, %arg1: i32, %arg2: i32) -> (i32, i32) {
    %c0_i32 = arith.constant 0 : i32
    return %arg0, %arg2 : i32, i32
  }
  func.func @transform_1(%arg0: i32, %arg1: i32, %arg2: i32) -> (i32, i32) {
    %c0_i32 = arith.constant 0 : i32
    return %arg2, %arg1 : i32, i32
  }
  func.func @transform_2(%arg0: i32, %arg1: i32, %arg2: i32) -> (i32, i32) {
    %c0_i32 = arith.constant 0 : i32
    %c0_i32_0 = arith.constant 0 : i32
    return %c0_i32, %arg1 : i32, i32
  }
  func.func @transform_3(%arg0: i32, %arg1: i32, %arg2: i32) -> (i32, i32) {
    %c0_i32 = arith.constant 0 : i32
    return %arg0, %arg1 : i32, i32
  }
}

</mosaic_0001>

<llo_original>
// kernel: single_classifier_forward.1
$region0: #{single_classifier_forward.1}
  #allocation0 [shape = 'u32[]', space=smem, size = 0x4, offset = 0x4, fixed_abs, tag = 'smem constant byte address 0x4 - core index']
  #allocation1 [shape = 'u32[72,128]{1,0:T(1,128)}', space=vmem, size = 0x9000, scoped, tag = 'internal scratch']
  #allocation2 [shape = 'f32[8,128]{1,0:T(8,128)}', space=vmem, size = 0x1000, scoped, tag = 'scratch operand']
  %s0 = inlined_call_operand.vmem [shape: f32[8,128], index: 0, kind: input, shape index: {}]
  %s1 = inlined_call_operand.hbm [shape: f32[128,128], index: 1, kind: input, shape index: {}]
  %s2 = inlined_call_operand.vmem [shape: f32[1,128], index: 2, kind: input, shape index: {}]
  %s3 = inlined_call_operand.hbm [shape: f32[8,128], index: 3, kind: output, shape index: {}]
  %s4 = sld [smem:[#allocation0]]
  $region34: #{single_classifier_forward.1} parent=0
    _
  %s6 = ssub.s32 1, %s4
  %s7 = scalar_select 0, %s6, %s4
  $region1: #{single_classifier_forward.1} parent=0
    #allocation3 [shape = 'u8[65536]{0}', space=vmem, size = 0x10000, scoped, tag = 'input window, operand 1, single buffered']
    #allocation4 [shape = 's32[1]{0}', space=sflag, size = 0x4, scoped, tag = 'scoped memory for single_classifier_forward.1']
    #allocation5 [shape = 's32[1]{0}', space=sflag, size = 0x4, scoped, tag = 'scoped memory for single_classifier_forward.1']
    #allocation6 [shape = 'u8[4096]{0}', space=vmem, size = 0x1000, scoped, tag = 'output window, operand 0, single buffered']
    %8 = vsyncpa [#allocation4], 0
    %9 = vsyncpa [#allocation5], 0
    // Predicated region
    $region2: #{single_classifier_forward.1} parent=1 // pred_check
      _
    $region3: #{single_classifier_forward.1} parent=1 // pred_check_branch
      %11 = sbr.rel (0) target = $region5
    $region4: #{single_classifier_forward.1} parent=1 // pred_region
      _
    $region5: #{single_classifier_forward.1} parent=1 // pred_fallthru
      _
    // Predicated region
    $region6: #{single_classifier_forward.1} parent=1 // pred_check
      _
    $region7: #{single_classifier_forward.1} parent=1 // pred_check_branch
      %13 = sbr.rel (0) target = $region9
    $region8: #{single_classifier_forward.1} parent=1 // pred_region
      %15 = vsyncadd [#allocation4], 0
      %s16 = sshll.u32 %s1, 4
      %s17 = int_to_ptr.hbm [resolvable:$true] %s16
      %s18 = sshll.u32 [#allocation3], 4
      %s19 = int_to_ptr.vmem [resolvable:$true] %s18
      %24 = dma.hbm_to_vmem [thread:$0]  %s17, 2048, %s19, [#allocation4], 128, 128, 8
    $region9: #{single_classifier_forward.1} parent=1 // pred_fallthru
      _
    // Predicated region
    $region10: #{single_classifier_forward.1} parent=1 // pred_check
      _
    $region11: #{single_classifier_forward.1} parent=1 // pred_check_branch
      %26 = sbr.rel (0) target = $region13
    $region12: #{single_classifier_forward.1} parent=1 // pred_region
      _
    $region13: #{single_classifier_forward.1} parent=1 // pred_fallthru
      _
    // Predicated region
    $region14: #{single_classifier_forward.1} parent=1 // pred_check
      _
    $region15: #{single_classifier_forward.1} parent=1 // pred_check_branch
      %28 = sbr.rel (0) target = $region17
    $region16: #{single_classifier_forward.1} parent=1 // pred_region
      %30 = dma.done [#allocation4], 2048
    $region17: #{single_classifier_forward.1} parent=1 // pred_fallthru
      _
    %p31 = scmp.eq.s32.totalorder 0, 0
    // Predicated region
    $region18: #{single_classifier_forward.1} parent=1 // pred_check
      %p32 = pneg %p31
    $region19: #{single_classifier_forward.1} parent=1 // pred_check_branch
      %34 = sbr.rel (%p32) target = $region21
    $region20: #{single_classifier_forward.1} parent=1 // pred_region
      %35 = vst [vmem:[#allocation2] sm:$0xff] 0.0
    $region21: #{single_classifier_forward.1} parent=1 // pred_fallthru
      _
    %v36 = vld [vmem:[#allocation2] sm:$0xff]
    %v37 = vld [vmem:[%s0] sm:$0xff]
    %v38 = vld [vmem:[#allocation3] sm:$0xff]
    %v39 = vld [vmem:[#allocation3 + $0x8] sm:$0xff]
    %v40 = vld [vmem:[#allocation3 + $0x10] sm:$0xff]
    %v41 = vld [vmem:[#allocation3 + $0x18] sm:$0xff]
    %v42 = vld [vmem:[#allocation3 + $0x20] sm:$0xff]
    %v43 = vld [vmem:[#allocation3 + $0x28] sm:$0xff]
    %v44 = vld [vmem:[#allocation3 + $0x30] sm:$0xff]
    %v45 = vld [vmem:[#allocation3 + $0x38] sm:$0xff]
    %v46 = vld [vmem:[#allocation3 + $0x40] sm:$0xff]
    %v47 = vld [vmem:[#allocation3 + $0x48] sm:$0xff]
    %v48 = vld [vmem:[#allocation3 + $0x50] sm:$0xff]
    %v49 = vld [vmem:[#allocation3 + $0x58] sm:$0xff]
    %v50 = vld [vmem:[#allocation3 + $0x60] sm:$0xff]
    %v51 = vld [vmem:[#allocation3 + $0x68] sm:$0xff]
    %v52 = vld [vmem:[#allocation3 + $0x70] sm:$0xff]
    %v53 = vld [vmem:[#allocation3 + $0x78] sm:$0xff]
    %54 = vmatpush.msra.mxu0 %v53
    %55 = vmatpush.msra.mxu0 %v52
    %56 = vmatpush.msra.mxu0 %v51
    %57 = vmatpush.msra.mxu0 %v50
    %58 = vmatpush.msra.mxu0 %v49
    %59 = vmatpush.msra.mxu0 %v48
    %60 = vmatpush.msra.mxu0 %v47
    %61 = vmatpush.msra.mxu0 %v46
    %62 = vmatpush.msra.mxu0 %v45
    %63 = vmatpush.msra.mxu0 %v44
    %64 = vmatpush.msra.mxu0 %v43
    %65 = vmatpush.msra.mxu0 %v42
    %66 = vmatpush.msra.mxu0 %v41
    %67 = vmatpush.msra.mxu0 %v40
    %68 = vmatpush.msra.mxu0 %v39
    %69 = vmatpush.msra.mxu0 %v38
    %70 = vmatmul.f32.gmra.mxu0 %v37
    %v71 = vpop.f32.mrf.mxu0
    %v72 = vadd.f32 0.0, %v71
    %73 = vdwg.mxu0
    %v74 = vadd.f32 %v36, %v72
    %75 = vst [vmem:[#allocation2] sm:$0xff] %v74
    // Predicated region
    $region22: #{single_classifier_forward.1} parent=1 // pred_check
      %p76 = pneg %p31
    $region23: #{single_classifier_forward.1} parent=1 // pred_check_branch
      %78 = sbr.rel (%p76) target = $region25
    $region24: #{single_classifier_forward.1} parent=1 // pred_region
      %v79 = vld [vmem:[#allocation2] sm:$0xff]
      %v80 = vld [vmem:[%s2] sm:$0x1]
      %v82 = vperm.slane %v80, 0
      %v84 = vadd.f32 %v79, %v82
      %85 = vst [vmem:[#allocation6] sm:$0xff] %v84
    $region25: #{single_classifier_forward.1} parent=1 // pred_fallthru
      _
    // Predicated region
    $region26: #{single_classifier_forward.1} parent=1 // pred_check
      _
    $region27: #{single_classifier_forward.1} parent=1 // pred_check_branch
      %87 = sbr.rel (0) target = $region29
    $region28: #{single_classifier_forward.1} parent=1 // pred_region
      %89 = vsyncadd [#allocation5], 0
      %s91 = sshll.u32 [#allocation6], 4
      %s92 = int_to_ptr.vmem [resolvable:$true] %s91
      %s93 = sshll.u32 %s3, 4
      %s94 = int_to_ptr.hbm [resolvable:$true] %s93
      %96 = dma.vmem_to_hbm [thread:$0]  %s92, 128, %s94, [#allocation5]
    $region29: #{single_classifier_forward.1} parent=1 // pred_fallthru
      _
    // Predicated region
    $region30: #{single_classifier_forward.1} parent=1 // pred_check
      _
    $region31: #{single_classifier_forward.1} parent=1 // pred_check_branch
      %98 = sbr.rel (0) target = $region33
    $region32: #{single_classifier_forward.1} parent=1 // pred_region
      %100 = dma.done [#allocation5], 128
    $region33: #{single_classifier_forward.1} parent=1 // pred_fallthru
      _
    %101 = vsyncpa [#allocation4], 1
    %102 = vsyncpa [#allocation5], 1

</llo_original>
